<compile_context>
chip_gen: v7x
topology: tpu7x:2x2x1
jax: 0.10.0
libtpu: 0.0.40
codegen_flags: <defaults>
</compile_context>

<pallas_src>
import functools
import math

import jax
import jax.numpy as jnp
from jax.experimental import pallas as pl
from jax.experimental.pallas import tpu as pltpu

_LANE = 128
_SUBLANE = 8
_MAX_BLOCK_LANES = 128 * 1024          # (8, 128K) f32 tile = 4 MiB
_VMEM_LIMIT_BYTES = 32 * 1024 * 1024   # safe on v5e/v6e/v7x, covers 2 streams x2 buffers


def _cdiv(a, b):
    return -(-a // b)


def _round_up(v, m):
    return _cdiv(v, m) * m


def _plan_grid(n_flat, nq):
    """Geometry for a flat interleaved array of n_flat elements viewed as (8, cols).

    cols and the block width are multiples of lcm(128, nq) so that every
    (row, block) segment starts on a sample boundary: the per-lane quantile
    index pattern (c % nq) is then identical for every block and row.
    """
    unit = (_LANE * nq) // math.gcd(_LANE, nq)
    cols = _round_up(max(_cdiv(n_flat, _SUBLANE), 1), unit)
    max_bl = max(unit, (_MAX_BLOCK_LANES // unit) * unit)
    if cols <= 2 * unit:
        bl = cols                                   # tiny input: one full-width block
    else:
        bl = min(max_bl, _round_up(_cdiv(cols, 2), unit))   # >=2 chunks (megacore)
    return cols, bl, _cdiv(cols, bl)


def _to_tiles(arr, cols):
    """Zero-pad a flat (row-major) f32 array to 8*cols elements, view as (8, cols)."""
    flat = jnp.asarray(arr, jnp.float32).reshape(-1)
    pad = _SUBLANE * cols - flat.shape[0]
    if pad:
        flat = jnp.pad(flat, (0, pad))
    return flat.reshape(_SUBLANE, cols)


def _atan_unit(t):
    """float32 atan(t) for |t| <= 1: odd degree-11 minimax polynomial.

    Max abs error ~2e-6.  Pure VPU madds (no divide, no range-reduction branch),
    keeping the single EUP slot free for tanh/log.
    """
    z = t * t
    p = jnp.float32(-1.1721200e-2)
    p = p * z + jnp.float32(5.2653320e-2)
    p = p * z + jnp.float32(-1.1643287e-1)
    p = p * z + jnp.float32(1.9354346e-1)
    p = p * z + jnp.float32(-3.3262347e-1)
    p = p * z + jnp.float32(9.9997726e-1)
    return t * p


# --------------------------------------------------------------------------
# Kernel 1: sBQR log-likelihood (summed over samples and quantiles)
# --------------------------------------------------------------------------
def _sbqr_kernel(tau_ref, y_ref, yhat_ref, out_ref, *, n_flat, cols_total,
                 binary_labels):
    """Per-block partial sum of the sBQR loss on the interleaved flat layout.

    tau_ref  : VMEM (1, BL)  f32   qs[c % nq] (same for every block / row)
    y_ref    : VMEM (8, BL)  f32   labels repeated per quantile
    yhat_ref : VMEM (8, BL)  f32   predictions (sample-major, quantile minor)
    out_ref  : VMEM (1, 8, 128)    per-sublane partial sums (lane-broadcast)
    """
    i = pl.program_id(0)
    yh = yhat_ref[...]
    yv = y_ref[...]
    tau = tau_ref[...]
    bl = yh.shape[1]

    # quantFactor = (1-tau)*ind + tau*(1-ind), ind = (sign+1)/2  ->  one select.
    # (sign==0 case irrelevant: atan(tanh(0)) == 0 -> cdf == tau either way.)
    qf = jnp.where(yh >= 0.0, 1.0 - tau, tau)
    cdf = tau + jnp.float32(4.0 / math.pi) * qf * _atan_unit(jnp.tanh(0.5 * yh))

    if binary_labels:
        # y in {0,1}: select the log argument first -> a single EUP log/element.
        contrib = jnp.log(jnp.where(yv > 0.5, 1.0 - cdf, cdf))
    else:
        contrib = yv * jnp.log(1.0 - cdf) + (1.0 - yv) * jnp.log(cdf)

    # Mask ragged-block lanes (col >= cols_total) and the flat tail padding
    # (flat index >= n_flat).  Built from (1,BL) and (8,1) iotas; kept as a
    # select so garbage / NaN in padded lanes cannot propagate.
    col = jax.lax.broadcasted_iota(jnp.int32, (1, bl), 1) + i * bl
    roff = jax.lax.broadcasted_iota(jnp.int32, (_SUBLANE, 1), 0) * cols_total
    valid = (col < cols_total) & ((roff + col) < n_flat)
    contrib = jnp.where(valid, contrib, 0.0)

    psum = jnp.sum(contrib, axis=1, keepdims=True)           # (8, 1)
    out_ref[...] = jnp.broadcast_to(psum, (_SUBLANE, _LANE))[None]


def sbqr_sum(y, yhat, qs, *, binary_labels=True):
    """sum_q baresBQR(y, yhat[:, q], qs[q]) as one Pallas reduction."""
    y = jnp.asarray(y, jnp.float32).reshape(-1)
    yhat = jnp.asarray(yhat, jnp.float32)
    n = y.shape[0]
    nq = len(qs)
    assert yhat.shape == (n, nq), (yhat.shape, (n, nq))

    n_flat = n * nq
    cols, bl, num_chunks = _plan_grid(n_flat, nq)

    yhat_t = _to_tiles(yhat, cols)                 # (8, cols) interleaved flat
    y_t = _to_tiles(jnp.repeat(y, nq), cols)       # labels expanded to match
    tau_row = jnp.tile(jnp.asarray(qs, jnp.float32), bl // nq).reshape(1, bl)

    kernel = functools.partial(_sbqr_kernel, n_flat=n_flat, cols_total=cols,
                               binary_labels=binary_labels)

    out = pl.pallas_call(
        kernel,
        out_shape=jax.ShapeDtypeStruct((num_chunks, _SUBLANE, _LANE), jnp.float32),
        grid_spec=pltpu.PrefetchScalarGridSpec(
            num_scalar_prefetch=0,
            grid=(num_chunks,),
            in_specs=[
                pl.BlockSpec((1, bl), lambda i: (0, 0)),           # tau pattern (const)
                pl.BlockSpec((_SUBLANE, bl), lambda i: (0, i)),    # labels
                pl.BlockSpec((_SUBLANE, bl), lambda i: (0, i)),    # predictions
            ],
            out_specs=pl.BlockSpec((1, _SUBLANE, _LANE), lambda i: (i, 0, 0)),
        ),
        compiler_params=pltpu.CompilerParams(
            dimension_semantics=("parallel",),
            vmem_limit_bytes=_VMEM_LIMIT_BYTES,
        ),
    )(tau_row, y_t, yhat_t)

    return jnp.sum(out[:, :, 0])


# --------------------------------------------------------------------------
# Kernel 2: quantile-crossing penalty on model outputs
# --------------------------------------------------------------------------
def _crossing_kernel(qidx_ref, x_ref, out_ref, *, n_flat, cols_total, n_q):
    """Per-block sum of relu(out[:, k] - out[:, k+1]) on the interleaved layout."""
    i = pl.program_id(0)
    x = x_ref[...]                       # (8, BL)
    qrow = qidx_ref[...]                 # (1, BL) f32 quantile index c % nq
    bl = x.shape[1]

    # Neighbouring quantile of the same sample via one lane rotate (XLU).
    rot = pltpu.roll(x, shift=bl - 1, axis=1)

    col = jax.lax.broadcasted_iota(jnp.int32, (1, bl), 1) + i * bl
    roff = jax.lax.broadcasted_iota(jnp.int32, (_SUBLANE, 1), 0) * cols_total
    valid = (col < cols_total) & ((roff + col) < n_flat)

    # Orientation probe: pltpu.roll should behave like jnp.roll (rot[c]==x[c+1]),
    # but we select between the two orientations in-kernel so correctness never
    # depends on the rotate convention.  Wrap-around lanes are masked either way
    # because every block row starts/ends on a sample boundary.
    iota_f = jax.lax.broadcasted_iota(jnp.int32, (1, bl), 1).astype(jnp.float32)
    probe = pltpu.roll(iota_f, shift=bl - 1, axis=1)
    is_next = probe[0:1, 0:1] == 1.0                           # (1, 1) bool

    pen_next = jnp.where(valid & (qrow < jnp.float32(n_q - 1)),
                         jnp.maximum(x - rot, 0.0), 0.0)       # rot = next quantile
    pen_prev = jnp.where(valid & (qrow > 0.5),
                         jnp.maximum(rot - x, 0.0), 0.0)       # rot = prev quantile

    s_next = jnp.sum(pen_next, axis=1, keepdims=True)          # (8, 1)
    s_prev = jnp.sum(pen_prev, axis=1, keepdims=True)
    psum = jnp.where(is_next, s_next, s_prev)
    out_ref[...] = jnp.broadcast_to(psum, (_SUBLANE, _LANE))[None]


def quantile_crossing_penalty(outputs, nq):
    """sum_n sum_{k<nq-1} relu(out[n, k] - out[n, k+1]) via one Pallas call.

    NOTE: the torch reference's `if idx == len(qs): break` never triggers and
    its idx+1 access would be out of bounds on the last pair; we implement the
    intended len(qs)-1 consecutive pairs.
    """
    outputs = jnp.asarray(outputs, jnp.float32)
    if nq <= 1 or outputs.shape[0] == 0:
        return jnp.float32(0.0)
    n = outputs.shape[0]
    n_flat = n * nq
    cols, bl, num_chunks = _plan_grid(n_flat, nq)

    x_t = _to_tiles(outputs[:, :nq], cols)
    qidx_row = jnp.tile(jnp.arange(nq, dtype=jnp.float32), bl // nq).reshape(1, bl)

    kernel = functools.partial(_crossing_kernel, n_flat=n_flat, cols_total=cols,
                               n_q=nq)

    out = pl.pallas_call(
        kernel,
        out_shape=jax.ShapeDtypeStruct((num_chunks, _SUBLANE, _LANE), jnp.float32),
        grid_spec=pltpu.PrefetchScalarGridSpec(
            num_scalar_prefetch=0,
            grid=(num_chunks,),
            in_specs=[
                pl.BlockSpec((1, bl), lambda i: (0, 0)),           # quantile idx (const)
                pl.BlockSpec((_SUBLANE, bl), lambda i: (0, i)),    # outputs
            ],
            out_specs=pl.BlockSpec((1, _SUBLANE, _LANE), lambda i: (i, 0, 0)),
        ),
        compiler_params=pltpu.CompilerParams(
            dimension_semantics=("parallel",),
            vmem_limit_bytes=_VMEM_LIMIT_BYTES,
        ),
    )(qidx_row, x_t)

    return jnp.sum(out[:, :, 0])


# --------------------------------------------------------------------------
# Forward pass (functional analogue of torch sBQRq.forward)
# --------------------------------------------------------------------------
def sbqrq_forward(y, yhat, qs, model_apply, loader, factor, *, binary_labels=True):
    main = sbqr_sum(y, yhat, qs, binary_labels=binary_labels) / len(qs)

    # TODO(synk): the arbitrary nn `model` forward + DataLoader iteration inside
    # regularization() has no Pallas equivalent; the model runs as plain JAX and
    # only the quantile-crossing penalty on its outputs is a Pallas kernel
    # (one launch on the concatenated loader outputs instead of one per batch).
    outs = [model_apply(inputs) for inputs, _labels in loader]
    if outs:
        reg = quantile_crossing_penalty(jnp.concatenate(outs, axis=0), len(qs))
    else:
        reg = jnp.float32(0.0)
    return main + jnp.float32(factor) * reg


class SBQRq:
    """Functional analogue of the torch sBQRq module."""

    def __call__(self, y, yhat, qs, model_apply, loader, factor):
        return sbqrq_forward(y, yhat, qs, model_apply, loader, factor)


# --------------------------------------------------------------------------
# Pure-JAX reference (mirrors the torch code)
# --------------------------------------------------------------------------
def _reference_forward(y, yhat, qs, outputs_list, factor):
    def bare_cdf(v, tau):
        ind = (jnp.sign(v) + 1.0) / 2.0
        qf = (1.0 - tau) * ind + tau * (1.0 - ind)
        return tau + 4.0 * qf / math.pi * jnp.arctan(jnp.tanh(v / 2.0))

    tmp = []
    for idx, q in enumerate(qs):
        c = bare_cdf(yhat[:, idx], q)
        tmp.append(jnp.dot(y, jnp.log(1.0 - c)) + jnp.dot(1.0 - y, jnp.log(c)))
    main = sum(tmp) / len(tmp)

    reg = 0.0
    for out in outputs_list:
        inner = 0.0
        for idx in range(len(qs) - 1):
            inner = inner + jnp.sum(jnp.maximum(out[:, idx] - out[:, idx + 1], 0.0))
        reg = reg + inner
    return main + factor * reg


if __name__ == "__main__":
    key = jax.random.PRNGKey(0)
    k_y, k_yhat, k_w, k_loader = jax.random.split(key, 4)

    n, n_feat = 256, 16
    qs = [0.25, 0.5, 0.75]
    factor = 0.5

    y = jax.random.bernoulli(k_y, 0.5, (n,)).astype(jnp.float32)
    yhat = jax.random.normal(k_yhat, (n, len(qs)), dtype=jnp.float32)

    # Tiny linear "model" and a 2-batch "loader" for the regularization term.
    w = 0.1 * jax.random.normal(k_w, (n_feat, len(qs)), dtype=jnp.float32)
    model_apply = lambda x: x @ w

    loader = []
    kk = k_loader
    for _ in range(2):
        kk, ka, kb = jax.random.split(kk, 3)
        xin = jax.random.normal(ka, (128, n_feat), dtype=jnp.float32)
        lab = jax.random.bernoulli(kb, 0.5, (128,)).astype(jnp.float32)
        loader.append((xin, lab))

    loss_fn = SBQRq()
    loss = loss_fn(y, yhat, qs, model_apply, loader, factor)
    loss = jax.block_until_ready(loss)

    ref = _reference_forward(y, yhat, qs, [model_apply(x) for x, _ in loader],
                             factor)
    ref = jax.block_until_ready(ref)

    assert bool(jnp.isfinite(loss)), float(loss)
    assert jnp.allclose(loss, ref, rtol=5e-4, atol=1e-2), (float(loss), float(ref))
    print("KERNEL_OK")
</pallas_src>

<mosaic_0001>
module attributes {stable_mosaic.version = 11 : i64} {
  func.func @_sbqr_kernel(%arg0: i32, %arg1: memref<1x384xf32, #tpu.memory_space<vmem>>, %arg2: memref<8x384xf32, #tpu.memory_space<vmem>>, %arg3: memref<8x384xf32, #tpu.memory_space<vmem>>, %arg4: memref<1x8x128xf32, #tpu.memory_space<vmem>>) attributes {dimension_semantics = [#tpu.dimension_semantics<parallel>], iteration_bounds = array<i64: 1>, scalar_prefetch = 0 : i64, scratch_operands = 0 : i64, tpu.core_type = #tpu.core_type<tc>, window_params = [{pipeline_mode = #tpu.pipeline_mode<synchronous>, transform_indices = @transform_0, window_bounds = array<i64: 1, 384>}, {transform_indices = @transform_1, window_bounds = array<i64: 8, 384>}, {transform_indices = @transform_2, window_bounds = array<i64: 8, 384>}, {transform_indices = @transform_3, window_bounds = array<i64: 1, 8, 128>}]} {
    %c0 = arith.constant 0 : index
    %c0_0 = arith.constant 0 : index
    %0 = vector.load %arg3[%c0, %c0_0] : memref<8x384xf32, #tpu.memory_space<vmem>>, vector<8x384xf32>
    %c0_1 = arith.constant 0 : index
    %c0_2 = arith.constant 0 : index
    %1 = vector.load %arg2[%c0_1, %c0_2] : memref<8x384xf32, #tpu.memory_space<vmem>>, vector<8x384xf32>
    %c0_3 = arith.constant 0 : index
    %c0_4 = arith.constant 0 : index
    %2 = vector.load %arg1[%c0_3, %c0_4] : memref<1x384xf32, #tpu.memory_space<vmem>>, vector<1x384xf32>
    %cst = arith.constant 0.000000e+00 : f32
    %3 = vector.broadcast %cst : f32 to vector<8x384xf32>
    %4 = arith.cmpf oge, %0, %3 : vector<8x384xf32>
    %cst_5 = arith.constant 1.000000e+00 : f32
    %5 = vector.broadcast %cst_5 : f32 to vector<1x384xf32>
    %6 = arith.subf %5, %2 : vector<1x384xf32>
    %7 = vector.shape_cast %6 : vector<1x384xf32> to vector<1x384xf32>
    %8 = vector.broadcast %7 : vector<1x384xf32> to vector<8x384xf32>
    %9 = vector.shape_cast %2 : vector<1x384xf32> to vector<1x384xf32>
    %10 = vector.broadcast %9 : vector<1x384xf32> to vector<8x384xf32>
    %11 = arith.select %4, %8, %10 : vector<8x384xi1>, vector<8x384xf32>
    %cst_6 = arith.constant 1.27323949 : f32
    %12 = vector.broadcast %cst_6 : f32 to vector<8x384xf32>
    %13 = arith.mulf %12, %11 : vector<8x384xf32>
    %cst_7 = arith.constant 5.000000e-01 : f32
    %14 = vector.broadcast %cst_7 : f32 to vector<8x384xf32>
    %15 = arith.mulf %14, %0 : vector<8x384xf32>
    %16 = math.tanh %15 : vector<8x384xf32>
    %17 = arith.mulf %16, %16 : vector<8x384xf32>
    %cst_8 = arith.constant -1.172120e-02 : f32
    %18 = vector.broadcast %cst_8 : f32 to vector<8x384xf32>
    %19 = arith.mulf %18, %17 : vector<8x384xf32>
    %cst_9 = arith.constant 0.0526533201 : f32
    %20 = vector.broadcast %cst_9 : f32 to vector<8x384xf32>
    %21 = arith.addf %19, %20 : vector<8x384xf32>
    %22 = arith.mulf %21, %17 : vector<8x384xf32>
    %cst_10 = arith.constant -0.116432868 : f32
    %23 = vector.broadcast %cst_10 : f32 to vector<8x384xf32>
    %24 = arith.addf %22, %23 : vector<8x384xf32>
    %25 = arith.mulf %24, %17 : vector<8x384xf32>
    %cst_11 = arith.constant 0.193543464 : f32
    %26 = vector.broadcast %cst_11 : f32 to vector<8x384xf32>
    %27 = arith.addf %25, %26 : vector<8x384xf32>
    %28 = arith.mulf %27, %17 : vector<8x384xf32>
    %cst_12 = arith.constant -0.332623482 : f32
    %29 = vector.broadcast %cst_12 : f32 to vector<8x384xf32>
    %30 = arith.addf %28, %29 : vector<8x384xf32>
    %31 = arith.mulf %30, %17 : vector<8x384xf32>
    %cst_13 = arith.constant 0.999977231 : f32
    %32 = vector.broadcast %cst_13 : f32 to vector<8x384xf32>
    %33 = arith.addf %31, %32 : vector<8x384xf32>
    %34 = arith.mulf %16, %33 : vector<8x384xf32>
    %35 = arith.mulf %13, %34 : vector<8x384xf32>
    %36 = vector.broadcast %2 : vector<1x384xf32> to vector<8x384xf32>
    %37 = arith.addf %36, %35 : vector<8x384xf32>
    %cst_14 = arith.constant 5.000000e-01 : f32
    %38 = vector.broadcast %cst_14 : f32 to vector<8x384xf32>
    %39 = arith.cmpf ogt, %1, %38 : vector<8x384xf32>
    %cst_15 = arith.constant 1.000000e+00 : f32
    %40 = vector.broadcast %cst_15 : f32 to vector<8x384xf32>
    %41 = arith.subf %40, %37 : vector<8x384xf32>
    %42 = arith.select %39, %41, %37 : vector<8x384xi1>, vector<8x384xf32>
    %43 = math.log %42 : vector<8x384xf32>
    %44 = tpu.iota {dimensions = array<i32: 1>} : vector<1x384xi32>
    %c384_i32 = arith.constant 384 : i32
    %45 = arith.muli %arg0, %c384_i32 : i32
    %46 = vector.broadcast %45 : i32 to vector<1x384xi32>
    %47 = arith.addi %44, %46 : vector<1x384xi32>
    %48 = tpu.iota {dimensions = array<i32: 0>} : vector<8x1xi32>
    %c384_i32_16 = arith.constant 384 : i32
    %49 = vector.broadcast %c384_i32_16 : i32 to vector<8x1xi32>
    %50 = arith.muli %48, %49 : vector<8x1xi32>
    %c384_i32_17 = arith.constant 384 : i32
    %51 = vector.broadcast %c384_i32_17 : i32 to vector<1x384xi32>
    %52 = arith.cmpi slt, %47, %51 : vector<1x384xi32>
    %53 = vector.broadcast %50 : vector<8x1xi32> to vector<8x384xi32>
    %54 = vector.broadcast %47 : vector<1x384xi32> to vector<8x384xi32>
    %55 = arith.addi %53, %54 : vector<8x384xi32>
    %c768_i32 = arith.constant 768 : i32
    %56 = vector.broadcast %c768_i32 : i32 to vector<8x384xi32>
    %57 = arith.cmpi slt, %55, %56 : vector<8x384xi32>
    %58 = vector.broadcast %52 : vector<1x384xi1> to vector<8x384xi1>
    %59 = arith.andi %58, %57 : vector<8x384xi1>
    %cst_18 = arith.constant 0.000000e+00 : f32
    %60 = vector.broadcast %cst_18 : f32 to vector<8x384xf32>
    %61 = arith.select %59, %43, %60 : vector<8x384xi1>, vector<8x384xf32>
    %cst_19 = arith.constant dense<0.000000e+00> : vector<8xf32>
    %62 = vector.multi_reduction <add>, %61, %cst_19 [1] : vector<8x384xf32> to vector<8xf32>
    %63 = vector.shape_cast %62 : vector<8xf32> to vector<8x1xf32>
    %64 = vector.shape_cast %63 : vector<8x1xf32> to vector<8x1xf32>
    %65 = vector.broadcast %64 : vector<8x1xf32> to vector<8x128xf32>
    %66 = vector.shape_cast %65 : vector<8x128xf32> to vector<1x8x128xf32>
    %c0_20 = arith.constant 0 : index
    %c0_21 = arith.constant 0 : index
    %c0_22 = arith.constant 0 : index
    %67 = vector.load %arg4[%c0_20, %c0_21, %c0_22] : memref<1x8x128xf32, #tpu.memory_space<vmem>>, vector<1x8x128xf32>
    tpu.vector_store %arg4[%c0_20, %c0_21, %c0_22], %66 {strides = array<i32>} : memref<1x8x128xf32, #tpu.memory_space<vmem>>, vector<1x8x128xf32>,
    return
  }
  func.func @transform_0(%arg0: i32) -> (i32, i32) {
    %c0_i32 = arith.constant 0 : i32
    %c0_i32_0 = arith.constant 0 : i32
    %c0_i32_1 = arith.constant 0 : i32
    return %c0_i32, %c0_i32_0 : i32, i32
  }
  func.func @transform_1(%arg0: i32) -> (i32, i32) {
    %c0_i32 = arith.constant 0 : i32
    %c0_i32_0 = arith.constant 0 : i32
    return %c0_i32, %arg0 : i32, i32
  }
  func.func @transform_2(%arg0: i32) -> (i32, i32) {
    %c0_i32 = arith.constant 0 : i32
    %c0_i32_0 = arith.constant 0 : i32
    return %c0_i32, %arg0 : i32, i32
  }
  func.func @transform_3(%arg0: i32) -> (i32, i32, i32) {
    %c0_i32 = arith.constant 0 : i32
    %c0_i32_0 = arith.constant 0 : i32
    %c0_i32_1 = arith.constant 0 : i32
    return %arg0, %c0_i32, %c0_i32_0 : i32, i32, i32
  }
}

</mosaic_0001>

<llo_original>
// kernel: tpu_custom_call.1
$region0: #{tpu_custom_call.1}
  #allocation0 [shape = 'u32[]', space=smem, size = 0x4, offset = 0x4, fixed_abs, tag = 'smem constant byte address 0x4 - core index']
  #allocation1 [shape = 'u32[144,128]{1,0:T(1,128)}', space=vmem, size = 0x12000, scoped, tag = 'internal scratch']
  %s0 = inlined_call_operand.hbm [shape: f32[1,384], index: 0, kind: input, shape index: {}]
  %s1 = inlined_call_operand.hbm [shape: f32[8,384], index: 1, kind: input, shape index: {}]
  %s2 = inlined_call_operand.hbm [shape: f32[8,384], index: 2, kind: input, shape index: {}]
  %s3 = inlined_call_operand.hbm [shape: f32[1,8,128], index: 3, kind: output, shape index: {}]
  %s4 = sld [smem:[#allocation0]]
  $region34: #{tpu_custom_call.1} parent=0
    _
  %s6 = ssub.s32 1, %s4
  %s7 = scalar_select 0, %s6, %s4
  $region1: #{tpu_custom_call.1} parent=0
    #allocation2 [shape = 'u8[1536]{0}', space=vmem, size = 0x800, scoped, tag = 'input window, operand 0, single buffered']
    #allocation3 [shape = 's32[1]{0}', space=sflag, size = 0x4, scoped, tag = 'scoped memory for tpu_custom_call.1']
    #allocation4 [shape = 's32[1]{0}', space=sflag, size = 0x4, scoped, tag = 'scoped memory for tpu_custom_call.1']
    #allocation5 [shape = 'u8[12288]{0}', space=vmem, size = 0x3000, scoped, tag = 'input window, operand 1, single buffered']
    #allocation6 [shape = 's32[1]{0}', space=sflag, size = 0x4, scoped, tag = 'scoped memory for tpu_custom_call.1']
    #allocation7 [shape = 'u8[12288]{0}', space=vmem, size = 0x3000, scoped, tag = 'input window, operand 2, single buffered']
    #allocation8 [shape = 'u8[4096]{0}', space=vmem, size = 0x1000, scoped, tag = 'output window, operand 0, single buffered']
    %8 = vsyncpa [#allocation3], 0
    %9 = vsyncpa [#allocation6], 0
    %10 = vsyncpa [#allocation4], 0
    // Predicated region
    $region2: #{tpu_custom_call.1} parent=1 // pred_check
      _
    $region3: #{tpu_custom_call.1} parent=1 // pred_check_branch
      %12 = sbr.rel (0) target = $region5
    $region4: #{tpu_custom_call.1} parent=1 // pred_region
      %s14 = ssub.s32 48, 48
      %15 = vsyncadd [#allocation3], %s14
      %s17 = sshll.u32 [#allocation2], 4
      %s18 = int_to_ptr.vmem [resolvable:$true] %s17
      %20 = dma.hbm_to_vmem [thread:$0]  %s0, 48, %s18, [#allocation3]
    $region5: #{tpu_custom_call.1} parent=1 // pred_fallthru
      _
    // Predicated region
    $region6: #{tpu_custom_call.1} parent=1 // pred_check
      _
    $region7: #{tpu_custom_call.1} parent=1 // pred_check_branch
      %22 = sbr.rel (0) target = $region9
    $region8: #{tpu_custom_call.1} parent=1 // pred_region
      %s24 = ssub.s32 384, 384
      %25 = vsyncadd [#allocation6], %s24
      %s27 = sshll.u32 [#allocation5], 4
      %s28 = int_to_ptr.vmem [resolvable:$true] %s27
      %30 = dma.hbm_to_vmem [thread:$0]  %s1, 384, %s28, [#allocation6]
    $region9: #{tpu_custom_call.1} parent=1 // pred_fallthru
      _
    // Predicated region
    $region10: #{tpu_custom_call.1} parent=1 // pred_check
      _
    $region11: #{tpu_custom_call.1} parent=1 // pred_check_branch
      %32 = sbr.rel (0) target = $region13
    $region12: #{tpu_custom_call.1} parent=1 // pred_region
      %s34 = ssub.s32 384, 384
      %35 = vsyncadd [#allocation6], %s34
      %s37 = sshll.u32 [#allocation7], 4
      %s38 = int_to_ptr.vmem [resolvable:$true] %s37
      %40 = dma.hbm_to_vmem [thread:$0]  %s2, 384, %s38, [#allocation6]
    $region13: #{tpu_custom_call.1} parent=1 // pred_fallthru
      _
    // Predicated region
    $region14: #{tpu_custom_call.1} parent=1 // pred_check
      _
    $region15: #{tpu_custom_call.1} parent=1 // pred_check_branch
      %42 = sbr.rel (0) target = $region17
    $region16: #{tpu_custom_call.1} parent=1 // pred_region
      %43 = dma.done [#allocation3], 48
    $region17: #{tpu_custom_call.1} parent=1 // pred_fallthru
      _
    // Predicated region
    $region18: #{tpu_custom_call.1} parent=1 // pred_check
      _
    $region19: #{tpu_custom_call.1} parent=1 // pred_check_branch
      %45 = sbr.rel (0) target = $region21
    $region20: #{tpu_custom_call.1} parent=1 // pred_region
      %46 = dma.done [#allocation6], 384
    $region21: #{tpu_custom_call.1} parent=1 // pred_fallthru
      _
    // Predicated region
    $region22: #{tpu_custom_call.1} parent=1 // pred_check
      _
    $region23: #{tpu_custom_call.1} parent=1 // pred_check_branch
      %48 = sbr.rel (0) target = $region25
    $region24: #{tpu_custom_call.1} parent=1 // pred_region
      %49 = dma.done [#allocation6], 384
    $region25: #{tpu_custom_call.1} parent=1 // pred_fallthru
      _
    %v50 = vld [vmem:[#allocation7] sm:$0xff]
    %v51 = vld [vmem:[#allocation7 + $0x8] sm:$0xff]
    %v52 = vld [vmem:[#allocation7 + $0x10] sm:$0xff]
    %v53 = vld [vmem:[#allocation5] sm:$0xff]
    %v54 = vld [vmem:[#allocation5 + $0x8] sm:$0xff]
    %v55 = vld [vmem:[#allocation5 + $0x10] sm:$0xff]
    %v56 = vld [vmem:[#allocation2] sm:$0x7]
    %vm57 = vcmp.ge.f32.partialorder %v50, 0.0
    %vm58 = vcmp.ge.f32.partialorder %v51, 0.0
    %vm59 = vcmp.ge.f32.partialorder %v52, 0.0
    %v60 = vsub.f32 1.0, %v56
    %v62 = vlaneseq
    %v63 = vshrl.u32 %v62, 7
    %v64 = vsub.s32 0, %v63
    %v65 = vrot.slane %v60, %v64
    %v66 = vlaneseq
    %v67 = vshrl.u32 %v66, 7
    %v68 = vsub.s32 1, %v67
    %v69 = vrot.slane %v60, %v68
    %v70 = vlaneseq
    %v71 = vshrl.u32 %v70, 7
    %v72 = vsub.s32 2, %v71
    %v73 = vrot.slane %v60, %v72
    %v78 = vlaneseq
    %v79 = vshrl.u32 %v78, 7
    %v80 = vsub.s32 0, %v79
    %v81 = vrot.slane %v56, %v80
    %v82 = vlaneseq
    %v83 = vshrl.u32 %v82, 7
    %v84 = vsub.s32 1, %v83
    %v85 = vrot.slane %v56, %v84
    %v86 = vlaneseq
    %v87 = vshrl.u32 %v86, 7
    %v88 = vsub.s32 2, %v87
    %v89 = vrot.slane %v56, %v88
    %v93 = vsel %vm57, %v65, %v81
    %v94 = vsel %vm58, %v69, %v85
    %v95 = vsel %vm59, %v73, %v89
    %v96 = vmul.f32 %v93, 1.2732395
    %v97 = vmul.f32 %v94, 1.2732395
    %v98 = vmul.f32 %v95, 1.2732395
    %v99 = vmul.f32 %v50, 0.5
    %v100 = vmul.f32 %v51, 0.5
    %v101 = vmul.f32 %v52, 0.5
    %v102 = vtanh.pop %v99
    %v103 = vtanh.pop %v100
    %v104 = vtanh.pop %v101
    %v105 = vmul.f32 %v102, %v102
    %v106 = vmul.f32 %v103, %v103
    %v107 = vmul.f32 %v104, %v104
    %v108 = vmul.f32 %v105, -0.0117212
    %v109 = vmul.f32 %v106, -0.0117212
    %v110 = vmul.f32 %v107, -0.0117212
    %v111 = vadd.f32 %v108, 0.05265332
    %v112 = vadd.f32 %v109, 0.05265332
    %v113 = vadd.f32 %v110, 0.05265332
    %v114 = vmul.f32 %v111, %v105
    %v115 = vmul.f32 %v112, %v106
    %v116 = vmul.f32 %v113, %v107
    %v117 = vadd.f32 %v114, -0.11643287
    %v118 = vadd.f32 %v115, -0.11643287
    %v119 = vadd.f32 %v116, -0.11643287
    %v120 = vmul.f32 %v117, %v105
    %v121 = vmul.f32 %v118, %v106
    %v122 = vmul.f32 %v119, %v107
    %v123 = vadd.f32 %v120, 0.19354346
    %v124 = vadd.f32 %v121, 0.19354346
    %v125 = vadd.f32 %v122, 0.19354346
    %v126 = vmul.f32 %v123, %v105
    %v127 = vmul.f32 %v124, %v106
    %v128 = vmul.f32 %v125, %v107
    %v129 = vadd.f32 %v126, -0.33262348
    %v130 = vadd.f32 %v127, -0.33262348
    %v131 = vadd.f32 %v128, -0.33262348
    %v132 = vmul.f32 %v129, %v105
    %v133 = vmul.f32 %v130, %v106
    %v134 = vmul.f32 %v131, %v107
    %v135 = vadd.f32 %v132, 0.99997723
    %v136 = vadd.f32 %v133, 0.99997723
    %v137 = vadd.f32 %v134, 0.99997723
    %v138 = vmul.f32 %v102, %v135
    %v139 = vmul.f32 %v103, %v136
    %v140 = vmul.f32 %v104, %v137
    %v141 = vmul.f32 %v96, %v138
    %v142 = vmul.f32 %v97, %v139
    %v143 = vmul.f32 %v98, %v140
    %v144 = vadd.f32 %v81, %v141
    %v145 = vadd.f32 %v85, %v142
    %v146 = vadd.f32 %v89, %v143
    %vm147 = vcmp.gt.f32.partialorder %v53, 0.5
    %vm148 = vcmp.gt.f32.partialorder %v54, 0.5
    %vm149 = vcmp.gt.f32.partialorder %v55, 0.5
    %v150 = vsub.f32 1.0, %v144
    %v151 = vsub.f32 1.0, %v145
    %v152 = vsub.f32 1.0, %v146
    %v153 = vsel %vm147, %v150, %v144
    %v154 = vsel %vm148, %v151, %v145
    %v155 = vsel %vm149, %v152, %v146
    %v156 = vlog2.pop %v153
    %v157 = vmul.f32 %v156, 0.6931472
    %v158 = vlog2.pop %v154
    %v159 = vmul.f32 %v158, 0.6931472
    %v160 = vlog2.pop %v155
    %v161 = vmul.f32 %v160, 0.6931472
    %v162 = vlaneseq
    %v163 = vand.u32 %v162, 127
    %v164 = vadd.s32 %v163, 128
    %v165 = vadd.s32 %v163, 256
    %s166 = smul.u32 0, 384
    %v167 = vstv %s166
    %v168 = vadd.s32 %v163, %v167
    %v169 = vadd.s32 %v164, %v167
    %v170 = vadd.s32 %v165, %v167
    %v171 = vlaneseq
    %v172 = vshrl.u32 %v171, 7
    %v173 = vmul.u32 %v172, 384
    %vm174 = vcmp.lt.s32.totalorder %v168, 384
    %vm175 = vcmp.lt.s32.totalorder %v169, 384
    %vm176 = vcmp.lt.s32.totalorder %v170, 384
    %v177 = vadd.s32 %v173, %v168
    %v178 = vadd.s32 %v173, %v169
    %v179 = vadd.s32 %v173, %v170
    %vm180 = vcmp.lt.s32.totalorder %v177, 768
    %vm181 = vcmp.lt.s32.totalorder %v178, 768
    %vm182 = vcmp.lt.s32.totalorder %v179, 768
    %v183 = vsel %vm174, 1, 0
    %v184 = vsel %vm175, 1, 0
    %v185 = vsel %vm176, 1, 0
    %vm186 = vcmp.eq.s32.totalorder %v183, 1
    %vm187 = vcmp.eq.s32.totalorder %v184, 1
    %vm188 = vcmp.eq.s32.totalorder %v185, 1
    %vm189 = vmand %vm186, %vm180
    %vm190 = vmand %vm187, %vm181
    %vm191 = vmand %vm188, %vm182
    %v192 = vsel %vm189, %v157, 0.0
    %v193 = vsel %vm190, %v159, 0.0
    %v194 = vsel %vm191, %v161, 0.0
    %v195 = vadd.f32 %v192, %v193
    %v196 = vadd.f32 %v195, %v194
    %197 = vadd.xlane.f32.xlu0 %v196
    %v198 = vpop.xlane.xlu0 %197
    %199 = vst [vmem:[#allocation8] sm:$0xff] %v198
    // Predicated region
    $region26: #{tpu_custom_call.1} parent=1 // pred_check
      _
    $region27: #{tpu_custom_call.1} parent=1 // pred_check_branch
      %201 = sbr.rel (0) target = $region29
    $region28: #{tpu_custom_call.1} parent=1 // pred_region
      %s203 = ssub.s32 128, 128
      %204 = vsyncadd [#allocation4], %s203
      %s206 = sshll.u32 [#allocation8], 4
      %s207 = int_to_ptr.vmem [resolvable:$true] %s206
      %209 = dma.vmem_to_hbm [thread:$0]  %s207, 128, %s3, [#allocation4]
    $region29: #{tpu_custom_call.1} parent=1 // pred_fallthru
      _
    // Predicated region
    $region30: #{tpu_custom_call.1} parent=1 // pred_check
      _
    $region31: #{tpu_custom_call.1} parent=1 // pred_check_branch
      %211 = sbr.rel (0) target = $region33
    $region32: #{tpu_custom_call.1} parent=1 // pred_region
      %212 = dma.done [#allocation4], 128
    $region33: #{tpu_custom_call.1} parent=1 // pred_fallthru
      _
    %213 = vsyncpa [#allocation3], 1
    %214 = vsyncpa [#allocation6], 1
    %215 = vsyncpa [#allocation4], 1

</llo_original>
